<compile_context>
chip_gen: v7x
topology: tpu7x:2x2x1
jax: 0.10.0
libtpu: 0.0.40
codegen_flags: <defaults>
</compile_context>

<pallas_src>
import functools

import jax
import jax.numpy as jnp
from jax import lax
from jax.experimental import pallas as pl
from jax.experimental.pallas import tpu as pltpu

BN_EPS = 1e-5
LANE = 128       # TPU lane width (last-dim padding target)
MAX_TB = 256     # max batch-tile rows (near-full MXU occupancy on v6e/v7x)


def _rup(n, m):
    return ((n + m - 1) // m) * m


def _pad128(n):
    return _rup(max(n, 1), LANE)


def _pad_to(a, shape):
    pads = [(0, t - s) for s, t in zip(a.shape, shape)]
    return jnp.pad(a, pads)


def _vmem_budget(arrays, out_tile_bytes):
    """Explicit scoped-VMEM budget: slabs + double-buffered tiles + margin."""
    est = sum(int(a.size) * a.dtype.itemsize for a in arrays) * 2
    est += out_tile_bytes * 2 + (4 << 20)
    return int(min(max(est, 16 << 20), 64 << 20))   # cap at v7x physical VMEM


# -----------------------------------------------------------------------------
# Kernel 1: HierarchicalBayesianLinear (+ fused BatchNorm(eval) + ReLU epilogue)
#   Local reparameterization: two MXU matmuls (mean / variance), one-hot group
#   selection on the VPU, per-output Gaussian noise supplied as a tiny input.
# -----------------------------------------------------------------------------
def _hbl_kernel(x_ref, oh_ref, eps_ref, ard_ref,
                wm_ref, s2_ref, bm_ref, sb2_ref,
                *rest, num_groups, out_pad, apply_bn):
    if apply_bn:
        bn_g, bn_b, bn_m, bn_v, out_ref = rest
    else:
        (out_ref,) = rest

    xa = x_ref[...] * ard_ref[...]                   # (TB, Ip)
    oh = oh_ref[...]                                 # (TB, Gp) one-hot (float)
    tb = xa.shape[0]

    # Two lane-dense MXU matmuls against pre-transposed slabs (Ip, G*Op).
    mean_all = jnp.dot(xa, wm_ref[...], preferred_element_type=jnp.float32)
    var_all = jnp.dot(xa * xa, s2_ref[...], preferred_element_type=jnp.float32)

    bm = bm_ref[...]                                 # (G, Op)
    sb2 = sb2_ref[...]                               # (G, Op)

    y = jnp.zeros((tb, out_pad), jnp.float32)
    var = jnp.zeros((tb, out_pad), jnp.float32)
    for g in range(num_groups):                      # static; num_groups small
        sel = oh[:, g:g + 1]
        y = y + sel * (mean_all[:, g * out_pad:(g + 1) * out_pad] + bm[g:g + 1, :])
        var = var + sel * (var_all[:, g * out_pad:(g + 1) * out_pad] + sb2[g:g + 1, :])

    # local reparameterization: one N(0,1) draw per (row, output feature)
    y = y + jnp.sqrt(var) * eps_ref[...]

    if apply_bn:
        y = (y - bn_m[...]) * lax.rsqrt(bn_v[...] + BN_EPS) * bn_g[...] + bn_b[...]
        y = jnp.maximum(y, 0.0)

    out_ref[...] = y


def hbl_forward(x_p, onehot_p, eps_p, lp, bn_p, *, tb, apply_bn):
    Bp, Ip = x_p.shape
    assert Ip == lp["in_pad"]
    G = lp["num_groups"]
    Op = lp["out_pad"]
    Gp = onehot_p.shape[1]
    grid = (Bp // tb,)

    kernel = functools.partial(_hbl_kernel, num_groups=G, out_pad=Op,
                               apply_bn=apply_bn)

    tile_b = lambda i: (i, 0)       # batch-tiled blocks
    const2 = lambda i: (0, 0)       # resident blocks (fetched once)

    in_specs = [
        pl.BlockSpec((tb, Ip), tile_b),          # x tile
        pl.BlockSpec((tb, Gp), tile_b),          # group one-hot tile (lane-dense)
        pl.BlockSpec((tb, Op), tile_b),          # per-output noise tile
        pl.BlockSpec((1, Ip), const2),           # ard_alpha
        pl.BlockSpec((Ip, G * Op), const2),      # W_mean^T   (all groups)
        pl.BlockSpec((Ip, G * Op), const2),      # (S_w^2)^T  (all groups)
        pl.BlockSpec((G, Op), const2),           # b_mean
        pl.BlockSpec((G, Op), const2),           # s_b^2
    ]
    inputs = [x_p, onehot_p, eps_p, lp["ard"], lp["wm_t"], lp["s2_t"],
              lp["b_mean"], lp["s_b2"]]
    if apply_bn:
        in_specs += [pl.BlockSpec((1, Op), const2)] * 4
        inputs += [bn_p["gamma"], bn_p["beta"], bn_p["mean"], bn_p["var"]]

    return pl.pallas_call(
        kernel,
        out_shape=jax.ShapeDtypeStruct((Bp, Op), jnp.float32),
        grid=grid,
        in_specs=in_specs,
        out_specs=pl.BlockSpec((tb, Op), tile_b),
        compiler_params=pltpu.CompilerParams(
            dimension_semantics=("parallel",),            # batch tiles independent
            vmem_limit_bytes=_vmem_budget(inputs, tb * Op * 4)),
    )(*inputs)


# -----------------------------------------------------------------------------
# Kernel 2: HierarchicalResidualBlock (BN -> ReLU -> FC -> BN -> ReLU -> FC + x)
#   grid over batch tiles; pre-transposed weights are resident constant blocks.
# -----------------------------------------------------------------------------
def _resblock_kernel(x_ref,
                     g1, b1, m1, v1, w1t, bb1,
                     g2, b2, m2, v2, w2t, bb2,
                     out_ref):
    x = x_ref[...]                                   # (TB, Dp)
    h = (x - m1[...]) * lax.rsqrt(v1[...] + BN_EPS) * g1[...] + b1[...]
    h = jnp.maximum(h, 0.0)
    # dropout = identity in eval mode
    h = jnp.dot(h, w1t[...], preferred_element_type=jnp.float32) + bb1[...]
    h = (h - m2[...]) * lax.rsqrt(v2[...] + BN_EPS) * g2[...] + b2[...]
    h = jnp.maximum(h, 0.0)
    h = jnp.dot(h, w2t[...], preferred_element_type=jnp.float32) + bb2[...]
    out_ref[...] = h + x


def resblock_forward(x_p, rp, *, tb):
    # TODO(synk): for very large D, add a contraction-tiled grid axis with an
    #             f32 accumulator instead of full (Dp, Dp) resident weights.
    Bp, Dp = x_p.shape
    grid = (Bp // tb,)
    tile_b = lambda i: (i, 0)
    const = lambda i: (0, 0)
    in_specs = [
        pl.BlockSpec((tb, Dp), tile_b),
        pl.BlockSpec((1, Dp), const), pl.BlockSpec((1, Dp), const),
        pl.BlockSpec((1, Dp), const), pl.BlockSpec((1, Dp), const),
        pl.BlockSpec((Dp, Dp), const), pl.BlockSpec((1, Dp), const),
        pl.BlockSpec((1, Dp), const), pl.BlockSpec((1, Dp), const),
        pl.BlockSpec((1, Dp), const), pl.BlockSpec((1, Dp), const),
        pl.BlockSpec((Dp, Dp), const), pl.BlockSpec((1, Dp), const),
    ]
    inputs = [x_p,
              rp["bn1_gamma"], rp["bn1_beta"], rp["bn1_mean"], rp["bn1_var"],
              rp["fc1_wt"], rp["fc1_b"],
              rp["bn2_gamma"], rp["bn2_beta"], rp["bn2_mean"], rp["bn2_var"],
              rp["fc2_wt"], rp["fc2_b"]]
    return pl.pallas_call(
        _resblock_kernel,
        out_shape=jax.ShapeDtypeStruct((Bp, Dp), jnp.float32),
        grid=grid,
        in_specs=in_specs,
        out_specs=pl.BlockSpec((tb, Dp), tile_b),
        compiler_params=pltpu.CompilerParams(
            dimension_semantics=("parallel",),
            vmem_limit_bytes=_vmem_budget(inputs, tb * Dp * 4)),
    )(*inputs)


# -----------------------------------------------------------------------------
# Parameter construction (mirrors the torch __init__ shapes / inits)
# -----------------------------------------------------------------------------
def _kaiming_uniform(key, shape, fan_in):
    bound = 1.0 / jnp.sqrt(jnp.float32(fan_in))
    return jax.random.uniform(key, shape, jnp.float32, -bound, bound)


def init_hbl(key, in_f, out_f, num_groups):
    ks = jax.random.split(key, 4)
    return dict(
        group_weight_mu=_kaiming_uniform(ks[0], (out_f, in_f), in_f),
        group_weight_rho=jnp.full((out_f, in_f), -5.0, jnp.float32),
        group_bias_mu=jax.random.uniform(ks[1], (out_f,), jnp.float32, -0.1, 0.1),
        group_bias_rho=jnp.full((out_f,), -5.0, jnp.float32),
        raw_weight_mu=_kaiming_uniform(ks[2], (num_groups, out_f, in_f), in_f),
        raw_weight_rho=jnp.full((num_groups, out_f, in_f), -5.0, jnp.float32),
        raw_bias_mu=jax.random.uniform(ks[3], (num_groups, out_f), jnp.float32, -0.1, 0.1),
        raw_bias_rho=jnp.full((num_groups, out_f), -5.0, jnp.float32),
        ard_alpha=jnp.ones((in_f,), jnp.float32),
    )


def init_bn(dim):
    # TODO(synk): load real running statistics for parity with a trained checkpoint.
    return dict(gamma=jnp.ones((dim,), jnp.float32),
                beta=jnp.zeros((dim,), jnp.float32),
                mean=jnp.zeros((dim,), jnp.float32),
                var=jnp.ones((dim,), jnp.float32))


def init_resblock(key, dim):
    ks = jax.random.split(key, 4)
    bound = 1.0 / jnp.sqrt(jnp.float32(dim))
    return dict(
        bn1=init_bn(dim), bn2=init_bn(dim),
        fc1_w=_kaiming_uniform(ks[0], (dim, dim), dim),
        fc1_b=jax.random.uniform(ks[1], (dim,), jnp.float32, -bound, bound),
        fc2_w=_kaiming_uniform(ks[2], (dim, dim), dim),
        fc2_b=jax.random.uniform(ks[3], (dim,), jnp.float32, -bound, bound),
    )


def build_params(key, input_dim, hidden_dims, output_dim, num_groups):
    n_pairs = len(hidden_dims) - 1
    ks = jax.random.split(key, 2 + 2 * max(n_pairs, 1))
    p = dict(input_dim=input_dim, hidden_dims=list(hidden_dims),
             output_dim=output_dim, num_groups=num_groups)
    p["input_layer"] = init_hbl(ks[0], input_dim, hidden_dims[0], num_groups)
    p["bn"] = [init_bn(d) for d in hidden_dims]
    p["hidden"] = []
    for i in range(n_pairs):
        p["hidden"].append(("res", init_resblock(ks[1 + 2 * i], hidden_dims[i])))
        p["hidden"].append(("hbl", init_hbl(ks[2 + 2 * i], hidden_dims[i],
                                            hidden_dims[i + 1], num_groups)))
    p["output_layer"] = init_hbl(ks[-1], hidden_dims[-1], output_dim, num_groups)
    return p


# -----------------------------------------------------------------------------
# One-time inference preparation: hoist group-invariant algebra, pre-transpose
# weight slabs for a straight (M,K)x(K,N) MXU feed, lane-pad everything.
# -----------------------------------------------------------------------------
def prepare_hbl(p):
    sp = jax.nn.softplus                                     # threshold-safe log1p(exp)
    G, O, I = p["raw_weight_mu"].shape
    gw_sig = sp(p["group_weight_rho"])                       # (O, I)
    gb_sig = sp(p["group_bias_rho"])                         # (O,)
    w_mean = p["group_weight_mu"][None] + gw_sig[None] * p["raw_weight_mu"]   # (G,O,I)
    s_w = gw_sig[None] * sp(p["raw_weight_rho"])             # (G,O,I)
    b_mean = p["group_bias_mu"][None] + gb_sig[None] * p["raw_bias_mu"]       # (G,O)
    s_b = gb_sig[None] * sp(p["raw_bias_rho"])               # (G,O)
    Op, Ip = _pad128(O), _pad128(I)
    # pre-transposed slabs: (Ip, G*Op); mean matmul and variance matmul share layout
    wm_t = _pad_to(jnp.transpose(w_mean, (2, 0, 1)), (Ip, G, Op)).reshape(Ip, G * Op)
    s2_t = _pad_to(jnp.transpose(s_w ** 2, (2, 0, 1)), (Ip, G, Op)).reshape(Ip, G * Op)
    return dict(
        num_groups=G, out_dim=O, in_dim=I, out_pad=Op, in_pad=Ip,
        wm_t=wm_t,
        s2_t=s2_t,
        b_mean=_pad_to(b_mean, (G, Op)),
        s_b2=_pad_to(s_b ** 2, (G, Op)),
        ard=_pad_to(p["ard_alpha"].reshape(1, I), (1, Ip)),
    )


def prepare_bn(bn, dim):
    Dp = _pad128(dim)
    z = jnp.zeros((1, Dp), jnp.float32)
    return dict(
        gamma=z.at[:, :dim].set(bn["gamma"].reshape(1, dim)),  # gamma pad = 0 keeps padded lanes zero
        beta=z.at[:, :dim].set(bn["beta"].reshape(1, dim)),
        mean=z.at[:, :dim].set(bn["mean"].reshape(1, dim)),
        var=jnp.ones((1, Dp), jnp.float32).at[:, :dim].set(bn["var"].reshape(1, dim)),
    )


def prepare_resblock(rp, dim):
    Dp = _pad128(dim)
    b1 = prepare_bn(rp["bn1"], dim)
    b2 = prepare_bn(rp["bn2"], dim)
    return dict(
        bn1_gamma=b1["gamma"], bn1_beta=b1["beta"], bn1_mean=b1["mean"], bn1_var=b1["var"],
        bn2_gamma=b2["gamma"], bn2_beta=b2["beta"], bn2_mean=b2["mean"], bn2_var=b2["var"],
        fc1_wt=_pad_to(rp["fc1_w"].T, (Dp, Dp)),   # (in, out) layout: straight MXU feed
        fc1_b=_pad_to(rp["fc1_b"].reshape(1, dim), (1, Dp)),
        fc2_wt=_pad_to(rp["fc2_w"].T, (Dp, Dp)),
        fc2_b=_pad_to(rp["fc2_b"].reshape(1, dim), (1, Dp)),
    )


def prepare_for_inference(params):
    prep = dict(num_groups=params["num_groups"],
                input_dim=params["input_dim"],
                output_dim=params["output_dim"])
    prep["input_layer"] = prepare_hbl(params["input_layer"])
    prep["bn"] = [prepare_bn(bn, d)
                  for bn, d in zip(params["bn"], params["hidden_dims"])]
    prep["hidden"] = []
    for kind, lp in params["hidden"]:
        if kind == "res":
            prep["hidden"].append(("res", prepare_resblock(lp, lp["fc1_w"].shape[0])))
        else:
            prep["hidden"].append(("hbl", prepare_hbl(lp)))
    prep["output_layer"] = prepare_hbl(params["output_layer"])
    return prep


# -----------------------------------------------------------------------------
# PredictionWrapper.forward : returns only the model output (KL discarded).
# -----------------------------------------------------------------------------
def prediction_wrapper_forward(prep, x, group_ids, seed=0):
    B = x.shape[0]
    G = prep["num_groups"]

    # batch tile: as large as possible (MXU occupancy) up to MAX_TB rows.
    tb = min(MAX_TB, _rup(B, 8))
    Bp = _rup(max(B, tb), tb)

    x_p = _pad_to(x.astype(jnp.float32), (Bp, prep["input_layer"]["in_pad"]))
    Gp = _pad128(G)
    onehot_p = _pad_to(jax.nn.one_hot(group_ids, G, dtype=jnp.float32), (Bp, Gp))

    # Per-layer output-noise draws (local reparameterization).  Matches the
    # torch per-sample eps semantics in distribution; keys are independent per layer.
    n_hbl = 2 + sum(1 for kind, _ in prep["hidden"] if kind == "hbl")
    keys = iter(jax.random.split(jax.random.PRNGKey(int(seed)), n_hbl))

    def eps_for(lp):
        return jax.random.normal(next(keys), (Bp, lp["out_pad"]), jnp.float32)

    # input layer (+ fused BN + ReLU)
    h = hbl_forward(x_p, onehot_p, eps_for(prep["input_layer"]),
                    prep["input_layer"], prep["bn"][0], tb=tb, apply_bn=True)

    # hidden layers: residual block then Bayesian linear (+ fused BN + ReLU)
    # TODO(synk): fuse each (resblock, HBL) pair into one pallas_call to remove
    #             the intermediate (Bp, Dp) HBM round-trip.
    bn_idx = 1
    for kind, lp in prep["hidden"]:
        if kind == "res":
            h = resblock_forward(h, lp, tb=tb)
        else:
            h = hbl_forward(h, onehot_p, eps_for(lp), lp, prep["bn"][bn_idx],
                            tb=tb, apply_bn=True)
            bn_idx += 1

    # output layer (no BN / ReLU epilogue, no dummy BN streams)
    out_layer = prep["output_layer"]
    out_p = hbl_forward(h, onehot_p, eps_for(out_layer), out_layer, None,
                        tb=tb, apply_bn=False)
    return out_p[:B, :prep["output_dim"]]
    # TODO(synk): KL losses are returned by the torch model but discarded by
    # PredictionWrapper, so they are intentionally not computed here.


if __name__ == "__main__":
    key = jax.random.PRNGKey(0)
    k_param, k_x, k_gid = jax.random.split(key, 3)

    B = 8
    INPUT_DIM = 8
    HIDDEN_DIMS = [16, 16]
    OUTPUT_DIM = 4
    NUM_GROUPS = 3

    params = build_params(k_param, INPUT_DIM, HIDDEN_DIMS, OUTPUT_DIM, NUM_GROUPS)
    prep = prepare_for_inference(params)

    x = jax.random.normal(k_x, (B, INPUT_DIM), jnp.float32)
    group_ids = jax.random.randint(k_gid, (B,), 0, NUM_GROUPS, dtype=jnp.int32)

    out = prediction_wrapper_forward(prep, x, group_ids, seed=1234)
    out = jax.block_until_ready(out)
    assert out.shape == (B, OUTPUT_DIM)
    assert out.dtype == jnp.float32
    assert bool(jnp.all(jnp.isfinite(out)))
    print("KERNEL_OK")
</pallas_src>

<mosaic_0001>
module attributes {stable_mosaic.version = 11 : i64} {
  func.func @_hbl_kernel(%arg0: i32, %arg1: memref<8x128xf32, #tpu.memory_space<vmem>>, %arg2: memref<8x128xf32, #tpu.memory_space<vmem>>, %arg3: memref<8x128xf32, #tpu.memory_space<vmem>>, %arg4: memref<1x128xf32, #tpu.memory_space<vmem>>, %arg5: memref<128x384xf32, #tpu.memory_space<vmem>>, %arg6: memref<128x384xf32, #tpu.memory_space<vmem>>, %arg7: memref<3x128xf32, #tpu.memory_space<vmem>>, %arg8: memref<3x128xf32, #tpu.memory_space<vmem>>, %arg9: memref<1x128xf32, #tpu.memory_space<vmem>>, %arg10: memref<1x128xf32, #tpu.memory_space<vmem>>, %arg11: memref<1x128xf32, #tpu.memory_space<vmem>>, %arg12: memref<1x128xf32, #tpu.memory_space<vmem>>, %arg13: memref<8x128xf32, #tpu.memory_space<vmem>>) attributes {dimension_semantics = [#tpu.dimension_semantics<parallel>], iteration_bounds = array<i64: 1>, scalar_prefetch = 0 : i64, scratch_operands = 0 : i64, tpu.core_type = #tpu.core_type<tc>, window_params = [{transform_indices = @transform_0, window_bounds = array<i64: 8, 128>}, {transform_indices = @transform_1, window_bounds = array<i64: 8, 128>}, {transform_indices = @transform_2, window_bounds = array<i64: 8, 128>}, {pipeline_mode = #tpu.pipeline_mode<synchronous>, transform_indices = @transform_3, window_bounds = array<i64: 1, 128>}, {pipeline_mode = #tpu.pipeline_mode<synchronous>, transform_indices = @transform_4, window_bounds = array<i64: 128, 384>}, {pipeline_mode = #tpu.pipeline_mode<synchronous>, transform_indices = @transform_5, window_bounds = array<i64: 128, 384>}, {pipeline_mode = #tpu.pipeline_mode<synchronous>, transform_indices = @transform_6, window_bounds = array<i64: 3, 128>}, {pipeline_mode = #tpu.pipeline_mode<synchronous>, transform_indices = @transform_7, window_bounds = array<i64: 3, 128>}, {pipeline_mode = #tpu.pipeline_mode<synchronous>, transform_indices = @transform_8, window_bounds = array<i64: 1, 128>}, {pipeline_mode = #tpu.pipeline_mode<synchronous>, transform_indices = @transform_9, window_bounds = array<i64: 1, 128>}, {pipeline_mode = #tpu.pipeline_mode<synchronous>, transform_indices = @transform_10, window_bounds = array<i64: 1, 128>}, {pipeline_mode = #tpu.pipeline_mode<synchronous>, transform_indices = @transform_11, window_bounds = array<i64: 1, 128>}, {transform_indices = @transform_12, window_bounds = array<i64: 8, 128>}]} {
    %c0 = arith.constant 0 : index
    %c0_0 = arith.constant 0 : index
    %0 = vector.load %arg1[%c0, %c0_0] : memref<8x128xf32, #tpu.memory_space<vmem>>, vector<8x128xf32>
    %c0_1 = arith.constant 0 : index
    %c0_2 = arith.constant 0 : index
    %1 = vector.load %arg4[%c0_1, %c0_2] : memref<1x128xf32, #tpu.memory_space<vmem>>, vector<1x128xf32>
    %2 = vector.broadcast %1 : vector<1x128xf32> to vector<8x128xf32>
    %3 = arith.mulf %0, %2 : vector<8x128xf32>
    %c0_3 = arith.constant 0 : index
    %c0_4 = arith.constant 0 : index
    %4 = vector.load %arg2[%c0_3, %c0_4] : memref<8x128xf32, #tpu.memory_space<vmem>>, vector<8x128xf32>
    %c0_5 = arith.constant 0 : index
    %c0_6 = arith.constant 0 : index
    %5 = vector.load %arg5[%c0_5, %c0_6] : memref<128x384xf32, #tpu.memory_space<vmem>>, vector<128x384xf32>
    %cst = arith.constant dense<0.000000e+00> : vector<8x384xf32>
    %6 = tpu.matmul %3, %5, %cst {dimension_numbers = #tpu.dot_dimension_numbers<[1], [0], [0], [1], [0, 0, 1, 1], [], []>} : vector<8x128xf32>, vector<128x384xf32>, vector<8x384xf32> -> vector<8x384xf32>
    %7 = arith.mulf %3, %3 : vector<8x128xf32>
    %c0_7 = arith.constant 0 : index
    %c0_8 = arith.constant 0 : index
    %8 = vector.load %arg6[%c0_7, %c0_8] : memref<128x384xf32, #tpu.memory_space<vmem>>, vector<128x384xf32>
    %cst_9 = arith.constant dense<0.000000e+00> : vector<8x384xf32>
    %9 = tpu.matmul %7, %8, %cst_9 {dimension_numbers = #tpu.dot_dimension_numbers<[1], [0], [0], [1], [0, 0, 1, 1], [], []>} : vector<8x128xf32>, vector<128x384xf32>, vector<8x384xf32> -> vector<8x384xf32>
    %c0_10 = arith.constant 0 : index
    %c0_11 = arith.constant 0 : index
    %10 = vector.load %arg7[%c0_10, %c0_11] : memref<3x128xf32, #tpu.memory_space<vmem>>, vector<3x128xf32>
    %c0_12 = arith.constant 0 : index
    %c0_13 = arith.constant 0 : index
    %11 = vector.load %arg8[%c0_12, %c0_13] : memref<3x128xf32, #tpu.memory_space<vmem>>, vector<3x128xf32>
    %cst_14 = arith.constant 0.000000e+00 : f32
    %12 = vector.broadcast %cst_14 : f32 to vector<8x128xf32>
    %cst_15 = arith.constant 0.000000e+00 : f32
    %13 = vector.broadcast %cst_15 : f32 to vector<8x128xf32>
    %14 = vector.extract_strided_slice %4 {offsets = [0, 0], sizes = [8, 1], strides = [1, 1]} : vector<8x128xf32> to vector<8x1xf32>
    %15 = vector.extract_strided_slice %6 {offsets = [0, 0], sizes = [8, 128], strides = [1, 1]} : vector<8x384xf32> to vector<8x128xf32>
    %16 = vector.extract_strided_slice %10 {offsets = [0, 0], sizes = [1, 128], strides = [1, 1]} : vector<3x128xf32> to vector<1x128xf32>
    %17 = vector.broadcast %16 : vector<1x128xf32> to vector<8x128xf32>
    %18 = arith.addf %15, %17 : vector<8x128xf32>
    %19 = vector.broadcast %14 : vector<8x1xf32> to vector<8x128xf32>
    %20 = arith.mulf %19, %18 : vector<8x128xf32>
    %21 = arith.addf %12, %20 : vector<8x128xf32>
    %22 = vector.extract_strided_slice %9 {offsets = [0, 0], sizes = [8, 128], strides = [1, 1]} : vector<8x384xf32> to vector<8x128xf32>
    %23 = vector.extract_strided_slice %11 {offsets = [0, 0], sizes = [1, 128], strides = [1, 1]} : vector<3x128xf32> to vector<1x128xf32>
    %24 = vector.broadcast %23 : vector<1x128xf32> to vector<8x128xf32>
    %25 = arith.addf %22, %24 : vector<8x128xf32>
    %26 = vector.broadcast %14 : vector<8x1xf32> to vector<8x128xf32>
    %27 = arith.mulf %26, %25 : vector<8x128xf32>
    %28 = arith.addf %13, %27 : vector<8x128xf32>
    %29 = vector.extract_strided_slice %4 {offsets = [0, 1], sizes = [8, 1], strides = [1, 1]} : vector<8x128xf32> to vector<8x1xf32>
    %30 = vector.extract_strided_slice %6 {offsets = [0, 128], sizes = [8, 128], strides = [1, 1]} : vector<8x384xf32> to vector<8x128xf32>
    %31 = vector.extract_strided_slice %10 {offsets = [1, 0], sizes = [1, 128], strides = [1, 1]} : vector<3x128xf32> to vector<1x128xf32>
    %32 = vector.broadcast %31 : vector<1x128xf32> to vector<8x128xf32>
    %33 = arith.addf %30, %32 : vector<8x128xf32>
    %34 = vector.broadcast %29 : vector<8x1xf32> to vector<8x128xf32>
    %35 = arith.mulf %34, %33 : vector<8x128xf32>
    %36 = arith.addf %21, %35 : vector<8x128xf32>
    %37 = vector.extract_strided_slice %9 {offsets = [0, 128], sizes = [8, 128], strides = [1, 1]} : vector<8x384xf32> to vector<8x128xf32>
    %38 = vector.extract_strided_slice %11 {offsets = [1, 0], sizes = [1, 128], strides = [1, 1]} : vector<3x128xf32> to vector<1x128xf32>
    %39 = vector.broadcast %38 : vector<1x128xf32> to vector<8x128xf32>
    %40 = arith.addf %37, %39 : vector<8x128xf32>
    %41 = vector.broadcast %29 : vector<8x1xf32> to vector<8x128xf32>
    %42 = arith.mulf %41, %40 : vector<8x128xf32>
    %43 = arith.addf %28, %42 : vector<8x128xf32>
    %44 = vector.extract_strided_slice %4 {offsets = [0, 2], sizes = [8, 1], strides = [1, 1]} : vector<8x128xf32> to vector<8x1xf32>
    %45 = vector.extract_strided_slice %6 {offsets = [0, 256], sizes = [8, 128], strides = [1, 1]} : vector<8x384xf32> to vector<8x128xf32>
    %46 = vector.extract_strided_slice %10 {offsets = [2, 0], sizes = [1, 128], strides = [1, 1]} : vector<3x128xf32> to vector<1x128xf32>
    %47 = vector.broadcast %46 : vector<1x128xf32> to vector<8x128xf32>
    %48 = arith.addf %45, %47 : vector<8x128xf32>
    %49 = vector.broadcast %44 : vector<8x1xf32> to vector<8x128xf32>
    %50 = arith.mulf %49, %48 : vector<8x128xf32>
    %51 = arith.addf %36, %50 : vector<8x128xf32>
    %52 = vector.extract_strided_slice %9 {offsets = [0, 256], sizes = [8, 128], strides = [1, 1]} : vector<8x384xf32> to vector<8x128xf32>
    %53 = vector.extract_strided_slice %11 {offsets = [2, 0], sizes = [1, 128], strides = [1, 1]} : vector<3x128xf32> to vector<1x128xf32>
    %54 = vector.broadcast %53 : vector<1x128xf32> to vector<8x128xf32>
    %55 = arith.addf %52, %54 : vector<8x128xf32>
    %56 = vector.broadcast %44 : vector<8x1xf32> to vector<8x128xf32>
    %57 = arith.mulf %56, %55 : vector<8x128xf32>
    %58 = arith.addf %43, %57 : vector<8x128xf32>
    %59 = math.sqrt %58 : vector<8x128xf32>
    %c0_16 = arith.constant 0 : index
    %c0_17 = arith.constant 0 : index
    %60 = vector.load %arg3[%c0_16, %c0_17] : memref<8x128xf32, #tpu.memory_space<vmem>>, vector<8x128xf32>
    %61 = arith.mulf %59, %60 : vector<8x128xf32>
    %62 = arith.addf %51, %61 : vector<8x128xf32>
    %c0_18 = arith.constant 0 : index
    %c0_19 = arith.constant 0 : index
    %63 = vector.load %arg11[%c0_18, %c0_19] : memref<1x128xf32, #tpu.memory_space<vmem>>, vector<1x128xf32>
    %64 = vector.broadcast %63 : vector<1x128xf32> to vector<8x128xf32>
    %65 = arith.subf %62, %64 : vector<8x128xf32>
    %c0_20 = arith.constant 0 : index
    %c0_21 = arith.constant 0 : index
    %66 = vector.load %arg12[%c0_20, %c0_21] : memref<1x128xf32, #tpu.memory_space<vmem>>, vector<1x128xf32>
    %cst_22 = arith.constant 9.99999974E-6 : f32
    %67 = vector.broadcast %cst_22 : f32 to vector<1x128xf32>
    %68 = arith.addf %66, %67 : vector<1x128xf32>
    %69 = math.rsqrt %68 : vector<1x128xf32>
    %70 = vector.broadcast %69 : vector<1x128xf32> to vector<8x128xf32>
    %71 = arith.mulf %65, %70 : vector<8x128xf32>
    %c0_23 = arith.constant 0 : index
    %c0_24 = arith.constant 0 : index
    %72 = vector.load %arg9[%c0_23, %c0_24] : memref<1x128xf32, #tpu.memory_space<vmem>>, vector<1x128xf32>
    %73 = vector.broadcast %72 : vector<1x128xf32> to vector<8x128xf32>
    %74 = arith.mulf %71, %73 : vector<8x128xf32>
    %c0_25 = arith.constant 0 : index
    %c0_26 = arith.constant 0 : index
    %75 = vector.load %arg10[%c0_25, %c0_26] : memref<1x128xf32, #tpu.memory_space<vmem>>, vector<1x128xf32>
    %76 = vector.broadcast %75 : vector<1x128xf32> to vector<8x128xf32>
    %77 = arith.addf %74, %76 : vector<8x128xf32>
    %cst_27 = arith.constant 0.000000e+00 : f32
    %78 = vector.broadcast %cst_27 : f32 to vector<8x128xf32>
    %79 = arith.maximumf %77, %78 : vector<8x128xf32>
    %c0_28 = arith.constant 0 : index
    %c0_29 = arith.constant 0 : index
    %80 = vector.load %arg13[%c0_28, %c0_29] : memref<8x128xf32, #tpu.memory_space<vmem>>, vector<8x128xf32>
    tpu.vector_store %arg13[%c0_28, %c0_29], %79 {strides = array<i32>} : memref<8x128xf32, #tpu.memory_space<vmem>>, vector<8x128xf32>,
    return
  }
  func.func @transform_0(%arg0: i32) -> (i32, i32) {
    %c0_i32 = arith.constant 0 : i32
    %c0_i32_0 = arith.constant 0 : i32
    return %arg0, %c0_i32 : i32, i32
  }
  func.func @transform_1(%arg0: i32) -> (i32, i32) {
    %c0_i32 = arith.constant 0 : i32
    %c0_i32_0 = arith.constant 0 : i32
    return %arg0, %c0_i32 : i32, i32
  }
  func.func @transform_2(%arg0: i32) -> (i32, i32) {
    %c0_i32 = arith.constant 0 : i32
    %c0_i32_0 = arith.constant 0 : i32
    return %arg0, %c0_i32 : i32, i32
  }
  func.func @transform_3(%arg0: i32) -> (i32, i32) {
    %c0_i32 = arith.constant 0 : i32
    %c0_i32_0 = arith.constant 0 : i32
    %c0_i32_1 = arith.constant 0 : i32
    return %c0_i32, %c0_i32_0 : i32, i32
  }
  func.func @transform_4(%arg0: i32) -> (i32, i32) {
    %c0_i32 = arith.constant 0 : i32
    %c0_i32_0 = arith.constant 0 : i32
    %c0_i32_1 = arith.constant 0 : i32
    return %c0_i32, %c0_i32_0 : i32, i32
  }
  func.func @transform_5(%arg0: i32) -> (i32, i32) {
    %c0_i32 = arith.constant 0 : i32
    %c0_i32_0 = arith.constant 0 : i32
    %c0_i32_1 = arith.constant 0 : i32
    return %c0_i32, %c0_i32_0 : i32, i32
  }
  func.func @transform_6(%arg0: i32) -> (i32, i32) {
    %c0_i32 = arith.constant 0 : i32
    %c0_i32_0 = arith.constant 0 : i32
    %c0_i32_1 = arith.constant 0 : i32
    return %c0_i32, %c0_i32_0 : i32, i32
  }
  func.func @transform_7(%arg0: i32) -> (i32, i32) {
    %c0_i32 = arith.constant 0 : i32
    %c0_i32_0 = arith.constant 0 : i32
    %c0_i32_1 = arith.constant 0 : i32
    return %c0_i32, %c0_i32_0 : i32, i32
  }
  func.func @transform_8(%arg0: i32) -> (i32, i32) {
    %c0_i32 = arith.constant 0 : i32
    %c0_i32_0 = arith.constant 0 : i32
    %c0_i32_1 = arith.constant 0 : i32
    return %c0_i32, %c0_i32_0 : i32, i32
  }
  func.func @transform_9(%arg0: i32) -> (i32, i32) {
    %c0_i32 = arith.constant 0 : i32
    %c0_i32_0 = arith.constant 0 : i32
    %c0_i32_1 = arith.constant 0 : i32
    return %c0_i32, %c0_i32_0 : i32, i32
  }
  func.func @transform_10(%arg0: i32) -> (i32, i32) {
    %c0_i32 = arith.constant 0 : i32
    %c0_i32_0 = arith.constant 0 : i32
    %c0_i32_1 = arith.constant 0 : i32
    return %c0_i32, %c0_i32_0 : i32, i32
  }
  func.func @transform_11(%arg0: i32) -> (i32, i32) {
    %c0_i32 = arith.constant 0 : i32
    %c0_i32_0 = arith.constant 0 : i32
    %c0_i32_1 = arith.constant 0 : i32
    return %c0_i32, %c0_i32_0 : i32, i32
  }
  func.func @transform_12(%arg0: i32) -> (i32, i32) {
    %c0_i32 = arith.constant 0 : i32
    %c0_i32_0 = arith.constant 0 : i32
    return %arg0, %c0_i32 : i32, i32
  }
}

</mosaic_0001>

<llo_original>
// kernel: tpu_custom_call.1
$region0: #{tpu_custom_call.1}
  #allocation0 [shape = 'u32[]', space=smem, size = 0x4, offset = 0x4, fixed_abs, tag = 'smem constant byte address 0x4 - core index']
  #allocation1 [shape = 'u32[144,128]{1,0:T(1,128)}', space=vmem, size = 0x12000, scoped, tag = 'internal scratch']
  %s0 = inlined_call_operand.hbm [shape: f32[8,128], index: 0, kind: input, shape index: {}]
  %s1 = inlined_call_operand.hbm [shape: f32[8,128], index: 1, kind: input, shape index: {}]
  %s2 = inlined_call_operand.hbm [shape: f32[8,128], index: 2, kind: input, shape index: {}]
  %s3 = inlined_call_operand.vmem [shape: f32[1,128], index: 3, kind: input, shape index: {}]
  %s4 = inlined_call_operand.hbm [shape: f32[128,384], index: 4, kind: input, shape index: {}]
  %s5 = inlined_call_operand.hbm [shape: f32[128,384], index: 5, kind: input, shape index: {}]
  %s6 = inlined_call_operand.vmem [shape: f32[3,128], index: 6, kind: input, shape index: {}]
  %s7 = inlined_call_operand.vmem [shape: f32[3,128], index: 7, kind: input, shape index: {}]
  %s8 = inlined_call_operand.vmem [shape: f32[1,128], index: 8, kind: input, shape index: {}]
  %s9 = inlined_call_operand.vmem [shape: f32[1,128], index: 9, kind: input, shape index: {}]
  %s10 = inlined_call_operand.vmem [shape: f32[1,128], index: 10, kind: input, shape index: {}]
  %s11 = inlined_call_operand.vmem [shape: f32[1,128], index: 11, kind: input, shape index: {}]
  %s12 = inlined_call_operand.hbm [shape: f32[8,128], index: 12, kind: output, shape index: {}]
  %s13 = sld [smem:[#allocation0]]
  $region78: #{tpu_custom_call.1} parent=0
    _
  %s15 = ssub.s32 1, %s13
  %s16 = scalar_select 0, %s15, %s13
  $region1: #{tpu_custom_call.1} parent=0
    #allocation2 [shape = 'u8[4096]{0}', space=vmem, size = 0x1000, scoped, tag = 'input window, operand 0, single buffered']
    #allocation3 [shape = 's32[1]{0}', space=sflag, size = 0x4, scoped, tag = 'scoped memory for tpu_custom_call.1']
    #allocation4 [shape = 's32[1]{0}', space=sflag, size = 0x4, scoped, tag = 'scoped memory for tpu_custom_call.1']
    #allocation5 [shape = 'u8[4096]{0}', space=vmem, size = 0x1000, scoped, tag = 'input window, operand 1, single buffered']
    #allocation6 [shape = 's32[1]{0}', space=sflag, size = 0x4, scoped, tag = 'scoped memory for tpu_custom_call.1']
    #allocation7 [shape = 'u8[4096]{0}', space=vmem, size = 0x1000, scoped, tag = 'input window, operand 2, single buffered']
    #allocation8 [shape = 'u8[196608]{0}', space=vmem, size = 0x30000, scoped, tag = 'input window, operand 4, single buffered']
    #allocation9 [shape = 's32[1]{0}', space=sflag, size = 0x4, scoped, tag = 'scoped memory for tpu_custom_call.1']
    #allocation10 [shape = 'u8[196608]{0}', space=vmem, size = 0x30000, scoped, tag = 'input window, operand 5, single buffered']
    #allocation11 [shape = 'u8[4096]{0}', space=vmem, size = 0x1000, scoped, tag = 'output window, operand 0, single buffered']
    %17 = vsyncpa [#allocation3], 0
    %18 = vsyncpa [#allocation6], 0
    %19 = vsyncpa [#allocation9], 0
    %20 = vsyncpa [#allocation4], 0
    // Predicated region
    $region2: #{tpu_custom_call.1} parent=1 // pred_check
      _
    $region3: #{tpu_custom_call.1} parent=1 // pred_check_branch
      %22 = sbr.rel (0) target = $region5
    $region4: #{tpu_custom_call.1} parent=1 // pred_region
      %s24 = ssub.s32 128, 128
      %25 = vsyncadd [#allocation3], %s24
      %s27 = sshll.u32 [#allocation2], 4
      %s28 = int_to_ptr.vmem [resolvable:$true] %s27
      %30 = dma.hbm_to_vmem [thread:$0]  %s0, 128, %s28, [#allocation3]
    $region5: #{tpu_custom_call.1} parent=1 // pred_fallthru
      _
    // Predicated region
    $region6: #{tpu_custom_call.1} parent=1 // pred_check
      _
    $region7: #{tpu_custom_call.1} parent=1 // pred_check_branch
      %32 = sbr.rel (0) target = $region9
    $region8: #{tpu_custom_call.1} parent=1 // pred_region
      %s34 = ssub.s32 128, 128
      %35 = vsyncadd [#allocation6], %s34
      %s37 = sshll.u32 [#allocation5], 4
      %s38 = int_to_ptr.vmem [resolvable:$true] %s37
      %40 = dma.hbm_to_vmem [thread:$0]  %s1, 128, %s38, [#allocation6]
    $region9: #{tpu_custom_call.1} parent=1 // pred_fallthru
      _
    // Predicated region
    $region10: #{tpu_custom_call.1} parent=1 // pred_check
      _
    $region11: #{tpu_custom_call.1} parent=1 // pred_check_branch
      %42 = sbr.rel (0) target = $region13
    $region12: #{tpu_custom_call.1} parent=1 // pred_region
      %s44 = ssub.s32 128, 128
      %45 = vsyncadd [#allocation6], %s44
      %s47 = sshll.u32 [#allocation7], 4
      %s48 = int_to_ptr.vmem [resolvable:$true] %s47
      %50 = dma.hbm_to_vmem [thread:$0]  %s2, 128, %s48, [#allocation6]
    $region13: #{tpu_custom_call.1} parent=1 // pred_fallthru
      _
    // Predicated region
    $region14: #{tpu_custom_call.1} parent=1 // pred_check
      _
    $region15: #{tpu_custom_call.1} parent=1 // pred_check_branch
      %52 = sbr.rel (0) target = $region17
    $region16: #{tpu_custom_call.1} parent=1 // pred_region
      _
    $region17: #{tpu_custom_call.1} parent=1 // pred_fallthru
      _
    // Predicated region
    $region18: #{tpu_custom_call.1} parent=1 // pred_check
      _
    $region19: #{tpu_custom_call.1} parent=1 // pred_check_branch
      %54 = sbr.rel (0) target = $region21
    $region20: #{tpu_custom_call.1} parent=1 // pred_region
      %s56 = ssub.s32 6144, 6144
      %57 = vsyncadd [#allocation9], %s56
      %s58 = sshll.u32 [#allocation8], 4
      %s59 = int_to_ptr.vmem [resolvable:$true] %s58
      %64 = dma.hbm_to_vmem [thread:$0]  %s4, 6144, %s59, [#allocation9], 384, 384, 24
    $region21: #{tpu_custom_call.1} parent=1 // pred_fallthru
      _
    // Predicated region
    $region22: #{tpu_custom_call.1} parent=1 // pred_check
      _
    $region23: #{tpu_custom_call.1} parent=1 // pred_check_branch
      %66 = sbr.rel (0) target = $region25
    $region24: #{tpu_custom_call.1} parent=1 // pred_region
      %s68 = ssub.s32 6144, 6144
      %69 = vsyncadd [#allocation9], %s68
      %s70 = sshll.u32 [#allocation10], 4
      %s71 = int_to_ptr.vmem [resolvable:$true] %s70
      %76 = dma.hbm_to_vmem [thread:$0]  %s5, 6144, %s71, [#allocation9], 384, 384, 24
    $region25: #{tpu_custom_call.1} parent=1 // pred_fallthru
      _
    // Predicated region
    $region26: #{tpu_custom_call.1} parent=1 // pred_check
      _
    $region27: #{tpu_custom_call.1} parent=1 // pred_check_branch
      %78 = sbr.rel (0) target = $region29
    $region28: #{tpu_custom_call.1} parent=1 // pred_region
      _
    $region29: #{tpu_custom_call.1} parent=1 // pred_fallthru
      _
    // Predicated region
    $region30: #{tpu_custom_call.1} parent=1 // pred_check
      _
    $region31: #{tpu_custom_call.1} parent=1 // pred_check_branch
      %80 = sbr.rel (0) target = $region33
    $region32: #{tpu_custom_call.1} parent=1 // pred_region
      _
    $region33: #{tpu_custom_call.1} parent=1 // pred_fallthru
      _
    // Predicated region
    $region34: #{tpu_custom_call.1} parent=1 // pred_check
      _
    $region35: #{tpu_custom_call.1} parent=1 // pred_check_branch
      %82 = sbr.rel (0) target = $region37
    $region36: #{tpu_custom_call.1} parent=1 // pred_region
      _
    $region37: #{tpu_custom_call.1} parent=1 // pred_fallthru
      _
    // Predicated region
    $region38: #{tpu_custom_call.1} parent=1 // pred_check
      _
    $region39: #{tpu_custom_call.1} parent=1 // pred_check_branch
      %84 = sbr.rel (0) target = $region41
    $region40: #{tpu_custom_call.1} parent=1 // pred_region
      _
    $region41: #{tpu_custom_call.1} parent=1 // pred_fallthru
      _
    // Predicated region
    $region42: #{tpu_custom_call.1} parent=1 // pred_check
      _
    $region43: #{tpu_custom_call.1} parent=1 // pred_check_branch
      %86 = sbr.rel (0) target = $region45
    $region44: #{tpu_custom_call.1} parent=1 // pred_region
      _
    $region45: #{tpu_custom_call.1} parent=1 // pred_fallthru
      _
    // Predicated region
    $region46: #{tpu_custom_call.1} parent=1 // pred_check
      _
    $region47: #{tpu_custom_call.1} parent=1 // pred_check_branch
      %88 = sbr.rel (0) target = $region49
    $region48: #{tpu_custom_call.1} parent=1 // pred_region
      _
    $region49: #{tpu_custom_call.1} parent=1 // pred_fallthru
      _
    // Predicated region
    $region50: #{tpu_custom_call.1} parent=1 // pred_check
      _
    $region51: #{tpu_custom_call.1} parent=1 // pred_check_branch
      %90 = sbr.rel (0) target = $region53
    $region52: #{tpu_custom_call.1} parent=1 // pred_region
      %91 = dma.done [#allocation3], 128
    $region53: #{tpu_custom_call.1} parent=1 // pred_fallthru
      _
    // Predicated region
    $region54: #{tpu_custom_call.1} parent=1 // pred_check
      _
    $region55: #{tpu_custom_call.1} parent=1 // pred_check_branch
      %93 = sbr.rel (0) target = $region57
    $region56: #{tpu_custom_call.1} parent=1 // pred_region
      %94 = dma.done [#allocation6], 128
    $region57: #{tpu_custom_call.1} parent=1 // pred_fallthru
      _
    // Predicated region
    $region58: #{tpu_custom_call.1} parent=1 // pred_check
      _
    $region59: #{tpu_custom_call.1} parent=1 // pred_check_branch
      %96 = sbr.rel (0) target = $region61
    $region60: #{tpu_custom_call.1} parent=1 // pred_region
      %97 = dma.done [#allocation6], 128
    $region61: #{tpu_custom_call.1} parent=1 // pred_fallthru
      _
    // Predicated region
    $region62: #{tpu_custom_call.1} parent=1 // pred_check
      _
    $region63: #{tpu_custom_call.1} parent=1 // pred_check_branch
      %99 = sbr.rel (0) target = $region65
    $region64: #{tpu_custom_call.1} parent=1 // pred_region
      %100 = dma.done [#allocation9], 6144
    $region65: #{tpu_custom_call.1} parent=1 // pred_fallthru
      _
    // Predicated region
    $region66: #{tpu_custom_call.1} parent=1 // pred_check
      _
    $region67: #{tpu_custom_call.1} parent=1 // pred_check_branch
      %102 = sbr.rel (0) target = $region69
    $region68: #{tpu_custom_call.1} parent=1 // pred_region
      %103 = dma.done [#allocation9], 6144
    $region69: #{tpu_custom_call.1} parent=1 // pred_fallthru
      _
    %v104 = vld [vmem:[#allocation2] sm:$0xff]
    %v105 = vld [vmem:[%s3] sm:$0x1]
    %v107 = vlaneseq
    %v108 = vshrl.u32 %v107, 7
    %v109 = vsub.s32 0, %v108
    %v110 = vrot.slane %v105, %v109
    %v112 = vmul.f32 %v104, %v110
    %v113 = vld [vmem:[#allocation5] sm:$0xff]
    %v114 = vld [vmem:[#allocation8] sm:$0xff]
    %v115 = vld [vmem:[#allocation8 + $0x8] sm:$0xff]
    %v116 = vld [vmem:[#allocation8 + $0x10] sm:$0xff]
    %v117 = vld [vmem:[#allocation8 + $0x18] sm:$0xff]
    %v118 = vld [vmem:[#allocation8 + $0x20] sm:$0xff]
    %v119 = vld [vmem:[#allocation8 + $0x28] sm:$0xff]
    %v120 = vld [vmem:[#allocation8 + $0x30] sm:$0xff]
    %v121 = vld [vmem:[#allocation8 + $0x38] sm:$0xff]
    %v122 = vld [vmem:[#allocation8 + $0x40] sm:$0xff]
    %v123 = vld [vmem:[#allocation8 + $0x48] sm:$0xff]
    %v124 = vld [vmem:[#allocation8 + $0x50] sm:$0xff]
    %v125 = vld [vmem:[#allocation8 + $0x58] sm:$0xff]
    %v126 = vld [vmem:[#allocation8 + $0x60] sm:$0xff]
    %v127 = vld [vmem:[#allocation8 + $0x68] sm:$0xff]
    %v128 = vld [vmem:[#allocation8 + $0x70] sm:$0xff]
    %v129 = vld [vmem:[#allocation8 + $0x78] sm:$0xff]
    %v130 = vld [vmem:[#allocation8 + $0x80] sm:$0xff]
    %v131 = vld [vmem:[#allocation8 + $0x88] sm:$0xff]
    %v132 = vld [vmem:[#allocation8 + $0x90] sm:$0xff]
    %v133 = vld [vmem:[#allocation8 + $0x98] sm:$0xff]
    %v134 = vld [vmem:[#allocation8 + $0xa0] sm:$0xff]
    %v135 = vld [vmem:[#allocation8 + $0xa8] sm:$0xff]
    %v136 = vld [vmem:[#allocation8 + $0xb0] sm:$0xff]
    %v137 = vld [vmem:[#allocation8 + $0xb8] sm:$0xff]
    %v138 = vld [vmem:[#allocation8 + $0xc0] sm:$0xff]
    %v139 = vld [vmem:[#allocation8 + $0xc8] sm:$0xff]
    %v140 = vld [vmem:[#allocation8 + $0xd0] sm:$0xff]
    %v141 = vld [vmem:[#allocation8 + $0xd8] sm:$0xff]
    %v142 = vld [vmem:[#allocation8 + $0xe0] sm:$0xff]
    %v143 = vld [vmem:[#allocation8 + $0xe8] sm:$0xff]
    %v144 = vld [vmem:[#allocation8 + $0xf0] sm:$0xff]
    %v145 = vld [vmem:[#allocation8 + $0xf8] sm:$0xff]
    %v146 = vld [vmem:[#allocation8 + $0x100] sm:$0xff]
    %v147 = vld [vmem:[#allocation8 + $0x108] sm:$0xff]
    %v148 = vld [vmem:[#allocation8 + $0x110] sm:$0xff]
    %v149 = vld [vmem:[#allocation8 + $0x118] sm:$0xff]
    %v150 = vld [vmem:[#allocation8 + $0x120] sm:$0xff]
    %v151 = vld [vmem:[#allocation8 + $0x128] sm:$0xff]
    %v152 = vld [vmem:[#allocation8 + $0x130] sm:$0xff]
    %v153 = vld [vmem:[#allocation8 + $0x138] sm:$0xff]
    %v154 = vld [vmem:[#allocation8 + $0x140] sm:$0xff]
    %v155 = vld [vmem:[#allocation8 + $0x148] sm:$0xff]
    %v156 = vld [vmem:[#allocation8 + $0x150] sm:$0xff]
    %v157 = vld [vmem:[#allocation8 + $0x158] sm:$0xff]
    %v158 = vld [vmem:[#allocation8 + $0x160] sm:$0xff]
    %v159 = vld [vmem:[#allocation8 + $0x168] sm:$0xff]
    %v160 = vld [vmem:[#allocation8 + $0x170] sm:$0xff]
    %v161 = vld [vmem:[#allocation8 + $0x178] sm:$0xff]
    %162 = vmatprep.subr.mxu0 %v115
    %163 = vmatpush1.msra.mxu0 %v114
    %164 = vmatprep.subr.mxu0 %v118
    %165 = vmatpush1.msra.mxu0 %v117
    %166 = vmatprep.subr.mxu0 %v121
    %167 = vmatpush1.msra.mxu0 %v120
    %168 = vmatprep.subr.mxu0 %v124
    %169 = vmatpush1.msra.mxu0 %v123
    %170 = vmatprep.subr.mxu0 %v127
    %171 = vmatpush1.msra.mxu0 %v126
    %172 = vmatprep.subr.mxu0 %v130
    %173 = vmatpush1.msra.mxu0 %v129
    %174 = vmatprep.subr.mxu0 %v133
    %175 = vmatpush1.msra.mxu0 %v132
    %176 = vmatprep.subr.mxu0 %v136
    %177 = vmatpush1.msra.mxu0 %v135
    %178 = vmatprep.subr.mxu0 %v139
    %179 = vmatpush1.msra.mxu0 %v138
    %180 = vmatprep.subr.mxu0 %v142
    %181 = vmatpush1.msra.mxu0 %v141
    %182 = vmatprep.subr.mxu0 %v145
    %183 = vmatpush1.msra.mxu0 %v144
    %184 = vmatprep.subr.mxu0 %v148
    %185 = vmatpush1.msra.mxu0 %v147
    %186 = vmatprep.subr.mxu0 %v151
    %187 = vmatpush1.msra.mxu0 %v150
    %188 = vmatprep.subr.mxu0 %v154
    %189 = vmatpush1.msra.mxu0 %v153
    %190 = vmatprep.subr.mxu0 %v157
    %191 = vmatpush1.msra.mxu0 %v156
    %192 = vmatprep.subr.mxu0 %v160
    %193 = vmatpush1.msra.mxu0 %v159
    %194 = vmatprep.subr.mxu0 0.0
    %195 = vmatpush1.msra.mxu0 0.0
    %196 = vmatprep.subr.mxu0 0.0
    %197 = vmatpush1.msra.mxu0 0.0
    %198 = vmatprep.subr.mxu0 0.0
    %199 = vmatpush1.msra.mxu0 0.0
    %200 = vmatprep.subr.mxu0 0.0
    %201 = vmatpush1.msra.mxu0 0.0
    %202 = vmatprep.subr.mxu0 0.0
    %203 = vmatpush1.msra.mxu0 0.0
    %204 = vmatprep.subr.mxu0 0.0
    %205 = vmatpush1.msra.mxu0 0.0
    %206 = vmatprep.subr.mxu0 0.0
    %207 = vmatpush1.msra.mxu0 0.0
    %208 = vmatprep.subr.mxu0 0.0
    %209 = vmatpush1.msra.mxu0 0.0
    %210 = vmatprep.subr.mxu0 0.0
    %211 = vmatpush1.msra.mxu0 0.0
    %212 = vmatprep.subr.mxu0 0.0
    %213 = vmatpush1.msra.mxu0 0.0
    %214 = vmatprep.subr.mxu0 0.0
    %215 = vmatpush1.msra.mxu0 0.0
    %216 = vmatprep.subr.mxu0 0.0
    %217 = vmatpush1.msra.mxu0 0.0
    %218 = vmatprep.subr.mxu0 0.0
    %219 = vmatpush1.msra.mxu0 0.0
    %220 = vmatprep.subr.mxu0 0.0
    %221 = vmatpush1.msra.mxu0 0.0
    %222 = vmatprep.subr.mxu0 0.0
    %223 = vmatpush1.msra.mxu0 0.0
    %224 = vmatprep.subr.mxu0 0.0
    %225 = vmatpush1.msra.mxu0 0.0
    %226 = vmatprep.mubr.f32.mxu0 0.0
    %227 = vmatmul.mubr.f32.gmra.mrb[0].mxu0 %v112
    %v228 = vpop.f32.mrb[0].mxu0
    %v229 = vadd.f32 0.0, %v228
    %v230 = vpop.f32.mrb[0].mxu0
    %v231 = vadd.f32 0.0, %v230
    %232 = vdwg.mxu0
    %233 = vmatprep.subr.mxu0 0.0
    %234 = vmatpush1.msra.mxu0 %v116
    %235 = vmatprep.subr.mxu0 0.0
    %236 = vmatpush1.msra.mxu0 %v119
    %237 = vmatprep.subr.mxu0 0.0
    %238 = vmatpush1.msra.mxu0 %v122
    %239 = vmatprep.subr.mxu0 0.0
    %240 = vmatpush1.msra.mxu0 %v125
    %241 = vmatprep.subr.mxu0 0.0
    %242 = vmatpush1.msra.mxu0 %v128
    %243 = vmatprep.subr.mxu0 0.0
    %244 = vmatpush1.msra.mxu0 %v131
    %245 = vmatprep.subr.mxu0 0.0
    %246 = vmatpush1.msra.mxu0 %v134
    %247 = vmatprep.subr.mxu0 0.0
    %248 = vmatpush1.msra.mxu0 %v137
    %249 = vmatprep.subr.mxu0 0.0
    %250 = vmatpush1.msra.mxu0 %v140
    %251 = vmatprep.subr.mxu0 0.0
    %252 = vmatpush1.msra.mxu0 %v143
    %253 = vmatprep.subr.mxu0 0.0
    %254 = vmatpush1.msra.mxu0 %v146
    %255 = vmatprep.subr.mxu0 0.0
    %256 = vmatpush1.msra.mxu0 %v149
    %257 = vmatprep.subr.mxu0 0.0
    %258 = vmatpush1.msra.mxu0 %v152
    %259 = vmatprep.subr.mxu0 0.0
    %260 = vmatpush1.msra.mxu0 %v155
    %261 = vmatprep.subr.mxu0 0.0
    %262 = vmatpush1.msra.mxu0 %v158
    %263 = vmatprep.subr.mxu0 0.0
    %264 = vmatpush1.msra.mxu0 %v161
    %265 = vmatprep.subr.mxu0 0.0
    %266 = vmatpush1.msra.mxu0 0.0
    %267 = vmatprep.subr.mxu0 0.0
    %268 = vmatpush1.msra.mxu0 0.0
    %269 = vmatprep.subr.mxu0 0.0
    %270 = vmatpush1.msra.mxu0 0.0
    %271 = vmatprep.subr.mxu0 0.0
    %272 = vmatpush1.msra.mxu0 0.0
    %273 = vmatprep.subr.mxu0 0.0
    %274 = vmatpush1.msra.mxu0 0.0
    %275 = vmatprep.subr.mxu0 0.0
    %276 = vmatpush1.msra.mxu0 0.0
    %277 = vmatprep.subr.mxu0 0.0
    %278 = vmatpush1.msra.mxu0 0.0
    %279 = vmatprep.subr.mxu0 0.0
    %280 = vmatpush1.msra.mxu0 0.0
    %281 = vmatprep.subr.mxu0 0.0
    %282 = vmatpush1.msra.mxu0 0.0
    %283 = vmatprep.subr.mxu0 0.0
    %284 = vmatpush1.msra.mxu0 0.0
    %285 = vmatprep.subr.mxu0 0.0
    %286 = vmatpush1.msra.mxu0 0.0
    %287 = vmatprep.subr.mxu0 0.0
    %288 = vmatpush1.msra.mxu0 0.0
    %289 = vmatprep.subr.mxu0 0.0
    %290 = vmatpush1.msra.mxu0 0.0
    %291 = vmatprep.subr.mxu0 0.0
    %292 = vmatpush1.msra.mxu0 0.0
    %293 = vmatprep.subr.mxu0 0.0
    %294 = vmatpush1.msra.mxu0 0.0
    %295 = vmatprep.subr.mxu0 0.0
    %296 = vmatpush1.msra.mxu0 0.0
    %297 = vmatprep.mubr.f32.mxu0 0.0
    %298 = vmatmul.mubr.f32.gmra.mrb[0].mxu0 %v112
    %v299 = vpop.f32.mrb[0].mxu0
    %v300 = vadd.f32 0.0, %v299
    %v301 = vpop.f32.mrb[0].mxu0
    %302 = vdwg.mxu0
    %v303 = vmul.f32 %v112, %v112
    %v304 = vld [vmem:[#allocation10] sm:$0xff]
    %v305 = vld [vmem:[#allocation10 + $0x8] sm:$0xff]
    %v306 = vld [vmem:[#allocation10 + $0x10] sm:$0xff]
    %v307 = vld [vmem:[#allocation10 + $0x18] sm:$0xff]
    %v308 = vld [vmem:[#allocation10 + $0x20] sm:$0xff]
    %v309 = vld [vmem:[#allocation10 + $0x28] sm:$0xff]
    %v310 = vld [vmem:[#allocation10 + $0x30] sm:$0xff]
    %v311 = vld [vmem:[#allocation10 + $0x38] sm:$0xff]
    %v312 = vld [vmem:[#allocation10 + $0x40] sm:$0xff]
    %v313 = vld [vmem:[#allocation10 + $0x48] sm:$0xff]
    %v314 = vld [vmem:[#allocation10 + $0x50] sm:$0xff]
    %v315 = vld [vmem:[#allocation10 + $0x58] sm:$0xff]
    %v316 = vld [vmem:[#allocation10 + $0x60] sm:$0xff]
    %v317 = vld [vmem:[#allocation10 + $0x68] sm:$0xff]
    %v318 = vld [vmem:[#allocation10 + $0x70] sm:$0xff]
    %v319 = vld [vmem:[#allocation10 + $0x78] sm:$0xff]
    %v320 = vld [vmem:[#allocation10 + $0x80] sm:$0xff]
    %v321 = vld [vmem:[#allocation10 + $0x88] sm:$0xff]
    %v322 = vld [vmem:[#allocation10 + $0x90] sm:$0xff]
    %v323 = vld [vmem:[#allocation10 + $0x98] sm:$0xff]
    %v324 = vld [vmem:[#allocation10 + $0xa0] sm:$0xff]
    %v325 = vld [vmem:[#allocation10 + $0xa8] sm:$0xff]
    %v326 = vld [vmem:[#allocation10 + $0xb0] sm:$0xff]
    %v327 = vld [vmem:[#allocation10 + $0xb8] sm:$0xff]
    %v328 = vld [vmem:[#allocation10 + $0xc0] sm:$0xff]
    %v329 = vld [vmem:[#allocation10 + $0xc8] sm:$0xff]
    %v330 = vld [vmem:[#allocation10 + $0xd0] sm:$0xff]
    %v331 = vld [vmem:[#allocation10 + $0xd8] sm:$0xff]
    %v332 = vld [vmem:[#allocation10 + $0xe0] sm:$0xff]
    %v333 = vld [vmem:[#allocation10 + $0xe8] sm:$0xff]
    %v334 = vld [vmem:[#allocation10 + $0xf0] sm:$0xff]
    %v335 = vld [vmem:[#allocation10 + $0xf8] sm:$0xff]
    %v336 = vld [vmem:[#allocation10 + $0x100] sm:$0xff]
    %v337 = vld [vmem:[#allocation10 + $0x108] sm:$0xff]
    %v338 = vld [vmem:[#allocation10 + $0x110] sm:$0xff]
    %v339 = vld [vmem:[#allocation10 + $0x118] sm:$0xff]
    %v340 = vld [vmem:[#allocation10 + $0x120] sm:$0xff]
    %v341 = vld [vmem:[#allocation10 + $0x128] sm:$0xff]
    %v342 = vld [vmem:[#allocation10 + $0x130] sm:$0xff]
    %v343 = vld [vmem:[#allocation10 + $0x138] sm:$0xff]
    %v344 = vld [vmem:[#allocation10 + $0x140] sm:$0xff]
    %v345 = vld [vmem:[#allocation10 + $0x148] sm:$0xff]
    %v346 = vld [vmem:[#allocation10 + $0x150] sm:$0xff]
    %v347 = vld [vmem:[#allocation10 + $0x158] sm:$0xff]
    %v348 = vld [vmem:[#allocation10 + $0x160] sm:$0xff]
    %v349 = vld [vmem:[#allocation10 + $0x168] sm:$0xff]
    %v350 = vld [vmem:[#allocation10 + $0x170] sm:$0xff]
    %v351 = vld [vmem:[#allocation10 + $0x178] sm:$0xff]
    %352 = vmatprep.subr.mxu0 %v305
    %353 = vmatpush1.msra.mxu0 %v304
    %354 = vmatprep.subr.mxu0 %v308
    %355 = vmatpush1.msra.mxu0 %v307
    %356 = vmatprep.subr.mxu0 %v311
    %357 = vmatpush1.msra.mxu0 %v310
    %358 = vmatprep.subr.mxu0 %v314
    %359 = vmatpush1.msra.mxu0 %v313
    %360 = vmatprep.subr.mxu0 %v317
    %361 = vmatpush1.msra.mxu0 %v316
    %362 = vmatprep.subr.mxu0 %v320
    %363 = vmatpush1.msra.mxu0 %v319
    %364 = vmatprep.subr.mxu0 %v323
    %365 = vmatpush1.msra.mxu0 %v322
    %366 = vmatprep.subr.mxu0 %v326
    %367 = vmatpush1.msra.mxu0 %v325
    %368 = vmatprep.subr.mxu0 %v329
    %369 = vmatpush1.msra.mxu0 %v328
    %370 = vmatprep.subr.mxu0 %v332
    %371 = vmatpush1.msra.mxu0 %v331
    %372 = vmatprep.subr.mxu0 %v335
    %373 = vmatpush1.msra.mxu0 %v334
    %374 = vmatprep.subr.mxu0 %v338
    %375 = vmatpush1.msra.mxu0 %v337
    %376 = vmatprep.subr.mxu0 %v341
    %377 = vmatpush1.msra.mxu0 %v340
    %378 = vmatprep.subr.mxu0 %v344
    %379 = vmatpush1.msra.mxu0 %v343
    %380 = vmatprep.subr.mxu0 %v347
    %381 = vmatpush1.msra.mxu0 %v346
    %382 = vmatprep.subr.mxu0 %v350
    %383 = vmatpush1.msra.mxu0 %v349
    %384 = vmatprep.subr.mxu0 0.0
    %385 = vmatpush1.msra.mxu0 0.0
    %386 = vmatprep.subr.mxu0 0.0
    %387 = vmatpush1.msra.mxu0 0.0
    %388 = vmatprep.subr.mxu0 0.0
    %389 = vmatpush1.msra.mxu0 0.0
    %390 = vmatprep.subr.mxu0 0.0
    %391 = vmatpush1.msra.mxu0 0.0
    %392 = vmatprep.subr.mxu0 0.0
    %393 = vmatpush1.msra.mxu0 0.0
    %394 = vmatprep.subr.mxu0 0.0
    %395 = vmatpush1.msra.mxu0 0.0
    %396 = vmatprep.subr.mxu0 0.0
    %397 = vmatpush1.msra.mxu0 0.0
    %398 = vmatprep.subr.mxu0 0.0
    %399 = vmatpush1.msra.mxu0 0.0
    %400 = vmatprep.subr.mxu0 0.0
    %401 = vmatpush1.msra.mxu0 0.0
    %402 = vmatprep.subr.mxu0 0.0
    %403 = vmatpush1.msra.mxu0 0.0
    %404 = vmatprep.subr.mxu0 0.0
    %405 = vmatpush1.msra.mxu0 0.0
    %406 = vmatprep.subr.mxu0 0.0
    %407 = vmatpush1.msra.mxu0 0.0
    %408 = vmatprep.subr.mxu0 0.0
    %409 = vmatpush1.msra.mxu0 0.0
    %410 = vmatprep.subr.mxu0 0.0
    %411 = vmatpush1.msra.mxu0 0.0
    %412 = vmatprep.subr.mxu0 0.0
    %413 = vmatpush1.msra.mxu0 0.0
    %414 = vmatprep.subr.mxu0 0.0
    %415 = vmatpush1.msra.mxu0 0.0
    %416 = vmatprep.mubr.f32.mxu0 0.0
    %417 = vmatmul.mubr.f32.gmra.mrb[0].mxu0 %v303
    %v418 = vpop.f32.mrb[0].mxu0
    %v419 = vadd.f32 0.0, %v418
    %v420 = vpop.f32.mrb[0].mxu0
    %v421 = vadd.f32 0.0, %v420
    %422 = vdwg.mxu0
    %423 = vmatprep.subr.mxu0 0.0
    %424 = vmatpush1.msra.mxu0 %v306
    %425 = vmatprep.subr.mxu0 0.0
    %426 = vmatpush1.msra.mxu0 %v309
    %427 = vmatprep.subr.mxu0 0.0
    %428 = vmatpush1.msra.mxu0 %v312
    %429 = vmatprep.subr.mxu0 0.0
    %430 = vmatpush1.msra.mxu0 %v315
    %431 = vmatprep.subr.mxu0 0.0
    %432 = vmatpush1.msra.mxu0 %v318
    %433 = vmatprep.subr.mxu0 0.0
    %434 = vmatpush1.msra.mxu0 %v321
    %435 = vmatprep.subr.mxu0 0.0
    %436 = vmatpush1.msra.mxu0 %v324
    %437 = vmatprep.subr.mxu0 0.0
    %438 = vmatpush1.msra.mxu0 %v327
    %439 = vmatprep.subr.mxu0 0.0
    %440 = vmatpush1.msra.mxu0 %v330
    %441 = vmatprep.subr.mxu0 0.0
    %442 = vmatpush1.msra.mxu0 %v333
    %443 = vmatprep.subr.mxu0 0.0
    %444 = vmatpush1.msra.mxu0 %v336
    %445 = vmatprep.subr.mxu0 0.0
    %446 = vmatpush1.msra.mxu0 %v339
    %447 = vmatprep.subr.mxu0 0.0
    %448 = vmatpush1.msra.mxu0 %v342
    %449 = vmatprep.subr.mxu0 0.0
    %450 = vmatpush1.msra.mxu0 %v345
    %451 = vmatprep.subr.mxu0 0.0
    %452 = vmatpush1.msra.mxu0 %v348
    %453 = vmatprep.subr.mxu0 0.0
    %454 = vmatpush1.msra.mxu0 %v351
    %455 = vmatprep.subr.mxu0 0.0
    %456 = vmatpush1.msra.mxu0 0.0
    %457 = vmatprep.subr.mxu0 0.0
    %458 = vmatpush1.msra.mxu0 0.0
    %459 = vmatprep.subr.mxu0 0.0
    %460 = vmatpush1.msra.mxu0 0.0
    %461 = vmatprep.subr.mxu0 0.0
    %462 = vmatpush1.msra.mxu0 0.0
    %463 = vmatprep.subr.mxu0 0.0
    %464 = vmatpush1.msra.mxu0 0.0
    %465 = vmatprep.subr.mxu0 0.0
    %466 = vmatpush1.msra.mxu0 0.0
    %467 = vmatprep.subr.mxu0 0.0
    %468 = vmatpush1.msra.mxu0 0.0
    %469 = vmatprep.subr.mxu0 0.0
    %470 = vmatpush1.msra.mxu0 0.0
    %471 = vmatprep.subr.mxu0 0.0
    %472 = vmatpush1.msra.mxu0 0.0
    %473 = vmatprep.subr.mxu0 0.0
    %474 = vmatpush1.msra.mxu0 0.0
    %475 = vmatprep.subr.mxu0 0.0
    %476 = vmatpush1.msra.mxu0 0.0
    %477 = vmatprep.subr.mxu0 0.0
    %478 = vmatpush1.msra.mxu0 0.0
    %479 = vmatprep.subr.mxu0 0.0
    %480 = vmatpush1.msra.mxu0 0.0
    %481 = vmatprep.subr.mxu0 0.0
    %482 = vmatpush1.msra.mxu0 0.0
    %483 = vmatprep.subr.mxu0 0.0
    %484 = vmatpush1.msra.mxu0 0.0
    %485 = vmatprep.subr.mxu0 0.0
    %486 = vmatpush1.msra.mxu0 0.0
    %487 = vmatprep.mubr.f32.mxu0 0.0
    %488 = vmatmul.mubr.f32.gmra.mrb[0].mxu0 %v303
    %v489 = vpop.f32.mrb[0].mxu0
    %v490 = vadd.f32 0.0, %v489
    %v491 = vpop.f32.mrb[0].mxu0
    %492 = vdwg.mxu0
    %v493 = vld [vmem:[%s6] sm:$0x7]
    %v494 = vld [vmem:[%s7] sm:$0x7]
    %v495 = vlaneseq
    %v496 = vshrl.u32 %v495, 7
    %v497 = vsub.s32 0, %v496
    %v498 = vrot.slane %v493, %v497
    %v499 = vadd.f32 %v229, %v498
    %501 = vset.pattern.permute.xlu0 0
    %502 = vperm.xlu0 %501, %v113
    %v503 = vpop.permute.xlu0 %502
    %v505 = vmul.f32 %v503, %v499
    %v506 = vadd.f32 %v505, 0.0
    %v507 = vlaneseq
    %v508 = vshrl.u32 %v507, 7
    %v509 = vsub.s32 0, %v508
    %v510 = vrot.slane %v494, %v509
    %v511 = vadd.f32 %v419, %v510
    %v512 = vmul.f32 %v503, %v511
    %v513 = vadd.f32 %v512, 0.0
    %v514 = vlaneseq
    %v515 = vshrl.u32 %v514, 7
    %v516 = vsub.s32 1, %v515
    %v517 = vrot.slane %v493, %v516
    %v518 = vadd.f32 %v231, %v517
    %519 = vset.pattern.permute.xlu0 1
    %520 = vperm.xlu0 %519, %v113
    %v521 = vpop.permute.xlu0 %520
    %v523 = vmul.f32 %v521, %v518
    %v524 = vadd.f32 %v506, %v523
    %v525 = vlaneseq
    %v526 = vshrl.u32 %v525, 7
    %v527 = vsub.s32 1, %v526
    %v528 = vrot.slane %v494, %v527
    %v529 = vadd.f32 %v421, %v528
    %v530 = vmul.f32 %v521, %v529
    %v531 = vadd.f32 %v513, %v530
    %v532 = vlaneseq
    %v533 = vshrl.u32 %v532, 7
    %v534 = vsub.s32 2, %v533
    %v535 = vrot.slane %v493, %v534
    %v536 = vadd.f32 %v300, %v535
    %537 = vset.pattern.permute.xlu0 2
    %538 = vperm.xlu0 %537, %v113
    %v539 = vpop.permute.xlu0 %538
    %v541 = vmul.f32 %v539, %v536
    %v542 = vadd.f32 %v524, %v541
    %v543 = vlaneseq
    %v544 = vshrl.u32 %v543, 7
    %v545 = vsub.s32 2, %v544
    %v546 = vrot.slane %v494, %v545
    %v547 = vadd.f32 %v490, %v546
    %v548 = vmul.f32 %v539, %v547
    %v549 = vadd.f32 %v531, %v548
    %v550 = vrsqrt.pop %v549
    %v551 = vmul.f32 %v549, %v550
    %vm552 = vcmp.eq.f32.partialorder %v549, inf
    %v553 = vsel %vm552, %v549, %v551
    %vm554 = vcmp.eq.f32.partialorder %v549, 0.0
    %v555 = vand.u32 %v549, 2147483648
    %v556 = vsel %vm554, %v555, %v553
    %v557 = vld [vmem:[#allocation7] sm:$0xff]
    %v558 = vmul.f32 %v556, %v557
    %v559 = vadd.f32 %v542, %v558
    %v560 = vld [vmem:[%s10] sm:$0x1]
    %v562 = vlaneseq
    %v563 = vshrl.u32 %v562, 7
    %v564 = vsub.s32 0, %v563
    %v565 = vrot.slane %v560, %v564
    %v567 = vsub.f32 %v559, %v565
    %v568 = vld [vmem:[%s11] sm:$0x1]
    %v569 = vadd.f32 %v568, 1e-05
    %v570 = vrsqrt.pop %v569
    %v572 = vlaneseq
    %v573 = vshrl.u32 %v572, 7
    %v574 = vsub.s32 0, %v573
    %v575 = vrot.slane %v570, %v574
    %v577 = vmul.f32 %v567, %v575
    %v578 = vld [vmem:[%s8] sm:$0x1]
    %v580 = vlaneseq
    %v581 = vshrl.u32 %v580, 7
    %v582 = vsub.s32 0, %v581
    %v583 = vrot.slane %v578, %v582
    %v585 = vmul.f32 %v577, %v583
    %v586 = vld [vmem:[%s9] sm:$0x1]
    %v588 = vlaneseq
    %v589 = vshrl.u32 %v588, 7
    %v590 = vsub.s32 0, %v589
    %v591 = vrot.slane %v586, %v590
    %v593 = vadd.f32 %v585, %v591
    %v594 = vmax.f32 %v593, 0.0
    %595 = vst [vmem:[#allocation11] sm:$0xff] %v594
    // Predicated region
    $region70: #{tpu_custom_call.1} parent=1 // pred_check
      _
    $region71: #{tpu_custom_call.1} parent=1 // pred_check_branch
      %597 = sbr.rel (0) target = $region73
    $region72: #{tpu_custom_call.1} parent=1 // pred_region
      %s599 = ssub.s32 128, 128
      %600 = vsyncadd [#allocation4], %s599
      %s602 = sshll.u32 [#allocation11], 4
      %s603 = int_to_ptr.vmem [resolvable:$true] %s602
      %605 = dma.vmem_to_hbm [thread:$0]  %s603, 128, %s12, [#allocation4]
    $region73: #{tpu_custom_call.1} parent=1 // pred_fallthru
      _
    // Predicated region
    $region74: #{tpu_custom_call.1} parent=1 // pred_check
      _
    $region75: #{tpu_custom_call.1} parent=1 // pred_check_branch
      %607 = sbr.rel (0) target = $region77
    $region76: #{tpu_custom_call.1} parent=1 // pred_region
      %608 = dma.done [#allocation4], 128
    $region77: #{tpu_custom_call.1} parent=1 // pred_fallthru
      _
    %609 = vsyncpa [#allocation3], 1
    %610 = vsyncpa [#allocation6], 1
    %611 = vsyncpa [#allocation9], 1
    %612 = vsyncpa [#allocation4], 1

</llo_original>
